<compile_context>
chip_gen: v6e
topology: v6e:2x2x1
jax: 0.10.0
libtpu: 0.0.40
codegen_flags: <defaults>
</compile_context>

<pallas_src>
import jax
import jax.numpy as jnp
import numpy as np
from jax import lax
from jax.experimental import pallas as pl
from jax.experimental.pallas import tpu as pltpu

_N_STABLE = 48            # first 48 landmarks drive the per-frame affine fit
_LANE_PAD = 128           # landmark axis zero-padded to one full lane width
_AUDIO_LANE = 1024        # audio samples per row (8 lane-dense f32 vregs)
_AUDIO_BLOCK_ROWS = 256   # 256 x 1024 f32 = 1 MiB per block (x2 double-buffer)
_T_BLOCK = 128            # frames per landmark grid step (when T > 128)


def _round_up(x, m):
    return ((x + m - 1) // m) * m


# --------------------------------------------------------------------------- #
# Audio: tiled two-pass global abs-max normalisation
# --------------------------------------------------------------------------- #
def _absmax_kernel(x_ref, amax_ref):
    m = jnp.max(jnp.abs(x_ref[...]), axis=1, keepdims=True)      # (rows, 1)
    m = jnp.max(m, axis=0, keepdims=True)                        # (1, 1)

    @pl.when(pl.program_id(0) == 0)
    def _():
        amax_ref[...] = jnp.zeros_like(amax_ref)

    amax_ref[...] = jnp.maximum(amax_ref[...], m)


def _scale_kernel(amax_ref, x_ref, o_ref):
    # scalar read from SMEM; the divide runs once per grid step (scalar unit),
    # floor avoids 0/0 for all-zero audio.
    inv = 1.0 / jnp.maximum(amax_ref[0, 0], 1e-30)
    o_ref[...] = x_ref[...] * inv


def _normalize_audio(mix):
    """Global abs-max normalisation of (B, N) audio, tiled over sample blocks."""
    B, N = mix.shape
    total = B * N
    rows = (total + _AUDIO_LANE - 1) // _AUDIO_LANE
    if rows > _AUDIO_BLOCK_ROWS:
        block_rows = _AUDIO_BLOCK_ROWS
        rows_p = _round_up(rows, block_rows)
    else:                      # small inputs: one full-array block
        block_rows = rows
        rows_p = rows
    pad = rows_p * _AUDIO_LANE - total

    flat = jnp.reshape(mix, (total,))
    if pad:
        flat = jnp.pad(flat, (0, pad))          # zeros never win the abs-max
    x2d = jnp.reshape(flat, (rows_p, _AUDIO_LANE))
    grid = rows_p // block_rows

    amax = pl.pallas_call(
        _absmax_kernel,
        out_shape=jax.ShapeDtypeStruct((1, 1), jnp.float32),
        grid=(grid,),
        in_specs=[pl.BlockSpec((block_rows, _AUDIO_LANE), lambda i: (i, 0))],
        out_specs=pl.BlockSpec((1, 1), lambda i: (0, 0)),
        compiler_params=pltpu.CompilerParams(
            dimension_semantics=("arbitrary",)),
    )(x2d)

    scaled = pl.pallas_call(
        _scale_kernel,
        out_shape=jax.ShapeDtypeStruct((rows_p, _AUDIO_LANE), jnp.float32),
        grid=(grid,),
        in_specs=[pl.BlockSpec(memory_space=pltpu.MemorySpace.SMEM),
                  pl.BlockSpec((block_rows, _AUDIO_LANE), lambda i: (i, 0))],
        out_specs=pl.BlockSpec((block_rows, _AUDIO_LANE), lambda i: (i, 0)),
        input_output_aliases={1: 0},   # normalised audio reuses the input buffer
        compiler_params=pltpu.CompilerParams(
            dimension_semantics=("parallel",)),
    )(amax, x2d)

    out = jnp.reshape(scaled, (rows_p * _AUDIO_LANE,))
    if pad:
        out = out[:total]
    return jnp.reshape(out, (B, N))


# --------------------------------------------------------------------------- #
# Landmarks: per-frame affine registration onto the mean face
# --------------------------------------------------------------------------- #
def _inv3x3(a, b, c, d, e, f, g, h, i):
    """Closed-form inverse of [[a,b,c],[d,e,f],[g,h,i]]; entries are (B,T,1)."""
    A = e * i - f * h
    B = -(d * i - f * g)
    C = d * h - e * g
    D = -(b * i - c * h)
    E = a * i - c * g
    F = -(a * h - b * g)
    G = b * f - c * e
    H = -(a * f - c * d)
    I = a * e - b * d
    det = a * A + b * B + c * C
    # EUP approx reciprocal + one Newton refinement (~1e-6 rel), off the VPU path
    r = pl.reciprocal(det, approx=True)
    r = r * (2.0 - det * r)
    # inverse = adjugate / det  (adjugate = transposed cofactor matrix)
    return (A * r, D * r, G * r,
            B * r, E * r, H * r,
            C * r, F * r, I * r)


def _register_kernel(tc_ref, tbar_ref, ld_ref, reg_ref):
    # planar, lane-dense layout: one (B, TT, 128) plane per coordinate
    x0 = ld_ref[0]
    x1 = ld_ref[1]
    x2 = ld_ref[2]
    jp = x0.shape[-1]

    lane = lax.broadcasted_iota(jnp.int32, (1, 1, jp), 2)
    stable = (lane < _N_STABLE).astype(jnp.float32)        # (1, 1, 128) lane mask
    inv_ns = jnp.float32(1.0 / _N_STABLE)

    # per-frame centroid of the 48 stable landmarks (masked sum / 48)
    sbar0 = jnp.sum(x0 * stable, axis=-1, keepdims=True) * inv_ns   # (B, TT, 1)
    sbar1 = jnp.sum(x1 * stable, axis=-1, keepdims=True) * inv_ns
    sbar2 = jnp.sum(x2 * stable, axis=-1, keepdims=True) * inv_ns

    # centered stable source points (non-stable / padded lanes zeroed)
    sc0 = (x0 - sbar0) * stable
    sc1 = (x1 - sbar1) * stable
    sc2 = (x2 - sbar2) * stable

    def dotl(u, v):                                        # lane reduce -> (B, TT, 1)
        return jnp.sum(u * v, axis=-1, keepdims=True)

    # symmetric per-frame source scatter matrix Cs
    s00 = dotl(sc0, sc0); s01 = dotl(sc0, sc1); s02 = dotl(sc0, sc2)
    s11 = dotl(sc1, sc1); s12 = dotl(sc1, sc2); s22 = dotl(sc2, sc2)

    # tiny relative Tikhonov term: keeps det > 0 for (near-)degenerate frames
    eps = 1e-6 * (s00 + s11 + s22) + 1e-12
    s00 = s00 + eps; s11 = s11 + eps; s22 = s22 + eps

    i00, i01, i02, i10, i11, i12, i20, i21, i22 = _inv3x3(
        s00, s01, s02, s01, s11, s12, s02, s12, s22)

    # mean-face (target) centered stable points, precomputed in the wrapper
    tc = tc_ref[...]                                       # (3, 128), zeros outside stable lanes
    tc0 = tc[0:1, :]
    tc1 = tc[1:2, :]
    tc2 = tc[2:3, :]

    # target/source cross-covariance Cts
    t00 = dotl(tc0, sc0); t01 = dotl(tc0, sc1); t02 = dotl(tc0, sc2)
    t10 = dotl(tc1, sc0); t11 = dotl(tc1, sc1); t12 = dotl(tc1, sc2)
    t20 = dotl(tc2, sc0); t21 = dotl(tc2, sc1); t22 = dotl(tc2, sc2)

    # affine linear part A = Cts @ Cs^{-1}   (per-frame scalars as (B, TT, 1))
    a00 = t00 * i00 + t01 * i10 + t02 * i20
    a01 = t00 * i01 + t01 * i11 + t02 * i21
    a02 = t00 * i02 + t01 * i12 + t02 * i22
    a10 = t10 * i00 + t11 * i10 + t12 * i20
    a11 = t10 * i01 + t11 * i11 + t12 * i21
    a12 = t10 * i02 + t11 * i12 + t12 * i22
    a20 = t20 * i00 + t21 * i10 + t22 * i20
    a21 = t20 * i01 + t21 * i11 + t22 * i21
    a22 = t20 * i02 + t21 * i12 + t22 * i22

    # registered = A @ (display - sbar) + tbar   (all 68 landmarks)
    d0 = x0 - sbar0
    d1 = x1 - sbar1
    d2 = x2 - sbar2

    tb = tbar_ref[...]                                     # (3, 128) lane-broadcast tbar
    tb0 = tb[0:1, :]
    tb1 = tb[1:2, :]
    tb2 = tb[2:3, :]

    # direct dense planar stores (no sublane concat / relayout, no duplicate output)
    reg_ref[0] = a00 * d0 + a01 * d1 + a02 * d2 + tb0
    reg_ref[1] = a10 * d0 + a11 * d1 + a12 * d2 + tb1
    reg_ref[2] = a20 * d0 + a21 * d1 + a22 * d2 + tb2


def _register_landmarks(ld, mean_face):
    """Per-frame affine registration of (B, T, 3, 68) landmarks onto mean_face."""
    B, T, C, J = ld.shape

    # planar, lane-dense input layout: (3, B, T, 128), zero-padded landmark axis.
    # TODO(synk): if the upstream landmark extractor ran on-device it should
    # emit this planar layout directly and skip this pad+transpose relayout.
    ld_planar = jnp.transpose(
        jnp.pad(ld, ((0, 0), (0, 0), (0, 0), (0, _LANE_PAD - J))), (2, 0, 1, 3))

    if T > _T_BLOCK:
        tt = _T_BLOCK
        tp = _round_up(T, tt)
        if tp != T:   # edge-pad frames so padded frames stay well-conditioned
            ld_planar = jnp.pad(
                ld_planar, ((0, 0), (0, 0), (0, tp - T), (0, 0)), mode="edge")
    else:
        tt = T
        tp = T
    grid_t = tp // tt

    # hoisted mean-face preprocessing (batch/frame invariant)
    mf = mean_face.astype(jnp.float32)
    mf48 = mf[:, :_N_STABLE]
    tbar = jnp.mean(mf48, axis=1, keepdims=True)                     # (3, 1)
    tc = mf48 - tbar                                                 # (3, 48)
    tc_pad = jnp.pad(tc, ((0, 0), (0, _LANE_PAD - _N_STABLE)))       # (3, 128)
    tbar_b = jnp.broadcast_to(tbar, (3, _LANE_PAD))                  # (3, 128)

    reg_planar = pl.pallas_call(
        _register_kernel,
        out_shape=jax.ShapeDtypeStruct((3, B, tp, _LANE_PAD), jnp.float32),
        grid=(grid_t,),
        in_specs=[
            pl.BlockSpec((3, _LANE_PAD), lambda t: (0, 0)),
            pl.BlockSpec((3, _LANE_PAD), lambda t: (0, 0)),
            pl.BlockSpec((3, B, tt, _LANE_PAD), lambda t: (0, 0, t, 0)),
        ],
        out_specs=pl.BlockSpec((3, B, tt, _LANE_PAD), lambda t: (0, 0, t, 0)),
        compiler_params=pltpu.CompilerParams(
            dimension_semantics=("parallel",)),
    )(tc_pad, tbar_b, ld_planar)

    return reg_planar[:, :, :T, :J]                                  # (3, B, T, 68)


# --------------------------------------------------------------------------- #
# Full forward (preprocessing stage)
# --------------------------------------------------------------------------- #
@jax.jit
def speech_vovit_forward(mixture, visuals, mean_face):
    """JAX/Pallas port of SpeechVoViT.forward (detect_faces=False,
    extract_landmarks=False), i.e. `visuals` are precomputed landmarks.

    mixture:   (B, N) audio
    visuals:   (B, T, 3, 68) landmarks
    mean_face: (3, 68) buffer
    """
    ld = visuals.astype(jnp.float32)

    reg_planar = _register_landmarks(ld, mean_face)          # (3, B, T, 68)
    registered = jnp.transpose(reg_planar, (1, 2, 0, 3))     # (B, T, 3, 68)
    # rearrange 'b t c j -> b c t j' [:, :2] .unsqueeze(-1)
    vovit_visual_in = jnp.transpose(reg_planar[:2], (1, 0, 2, 3))[..., None]

    mix_n = _normalize_audio(mixture.astype(jnp.float32))

    # TODO(synk): self.vovit(mixture, ld) backbone is not in the provided source.
    return {
        "mixture_normalized": mix_n,
        "registered_landmarks": registered,
        "vovit_visual_input": vovit_visual_in,
    }


# --------------------------------------------------------------------------- #
# Plain-JAX reference & self-test
# --------------------------------------------------------------------------- #
def _reference_register(ld, mf):
    """Plain-JAX reference identical to the PyTorch fit():
    tr = target_h @ pinv(source_h); reg = (tr @ display_h)[:3]."""
    tgt_h = jnp.concatenate([mf[:, :_N_STABLE],
                             jnp.ones((1, _N_STABLE), mf.dtype)], axis=0)

    def per_frame(x):
        src_h = jnp.concatenate([x[:, :_N_STABLE],
                                 jnp.ones((1, _N_STABLE), x.dtype)], axis=0)
        tr = tgt_h @ jnp.linalg.pinv(src_h)
        disp_h = jnp.concatenate([x, jnp.ones((1, x.shape[1]), x.dtype)], axis=0)
        return (tr @ disp_h)[:3]

    return jax.vmap(jax.vmap(per_frame))(ld)


if __name__ == "__main__":
    key = jax.random.PRNGKey(0)
    B, T, J = 2, 8, 68
    N = 2048
    k_mf, k_ld, k_mix = jax.random.split(key, 3)

    # Deterministic synthetic "speech_mean_face" buffer (3, 68).
    mean_face = jax.random.normal(k_mf, (3, J), dtype=jnp.float32)
    # Landmark sequences: mean face + per-frame jitter -> well-conditioned fits.
    visuals = (mean_face[None, None] +
               0.5 * jax.random.normal(k_ld, (B, T, 3, J), dtype=jnp.float32))
    mixture = jax.random.normal(k_mix, (B, N), dtype=jnp.float32)

    out = speech_vovit_forward(mixture, visuals, mean_face)
    out = jax.block_until_ready(out)

    # Correctness checks against plain-JAX references.
    ref_reg = np.asarray(_reference_register(visuals, mean_face))      # (B, T, 3, 68)
    np.testing.assert_allclose(np.asarray(out["registered_landmarks"]),
                               ref_reg, rtol=1e-2, atol=5e-3)

    ref_mix = np.asarray(mixture / jnp.max(jnp.abs(mixture)))
    np.testing.assert_allclose(np.asarray(out["mixture_normalized"]),
                               ref_mix, rtol=1e-5, atol=1e-6)

    vis = np.asarray(out["vovit_visual_input"])
    assert vis.shape == (B, 2, T, J, 1)
    np.testing.assert_allclose(vis[..., 0],
                               ref_reg.transpose(0, 2, 1, 3)[:, :2],
                               rtol=1e-2, atol=5e-3)

    print("KERNEL_OK")
</pallas_src>

<mosaic_0001>
module attributes {stable_mosaic.version = 11 : i64} {
  func.func @_register_kernel(%arg0: i32, %arg1: memref<3x128xf32, #tpu.memory_space<vmem>>, %arg2: memref<3x128xf32, #tpu.memory_space<vmem>>, %arg3: memref<3x2x8x128xf32, #tpu.memory_space<vmem>>, %arg4: memref<3x2x8x128xf32, #tpu.memory_space<vmem>>) attributes {dimension_semantics = [#tpu.dimension_semantics<parallel>], iteration_bounds = array<i64: 1>, scalar_prefetch = 0 : i64, scratch_operands = 0 : i64, tpu.core_type = #tpu.core_type<tc>, window_params = [{pipeline_mode = #tpu.pipeline_mode<synchronous>, transform_indices = @transform_0, window_bounds = array<i64: 3, 128>}, {pipeline_mode = #tpu.pipeline_mode<synchronous>, transform_indices = @transform_1, window_bounds = array<i64: 3, 128>}, {transform_indices = @transform_2, window_bounds = array<i64: 3, 2, 8, 128>}, {transform_indices = @transform_3, window_bounds = array<i64: 3, 2, 8, 128>}]} {
    %c0 = arith.constant 0 : index
    %c0_0 = arith.constant 0 : index
    %c0_1 = arith.constant 0 : index
    %c0_2 = arith.constant 0 : index
    %0 = vector.load %arg3[%c0, %c0_0, %c0_1, %c0_2] : memref<3x2x8x128xf32, #tpu.memory_space<vmem>>, vector<1x2x8x128xf32>
    %1 = vector.shape_cast %0 : vector<1x2x8x128xf32> to vector<2x8x128xf32>
    %c1 = arith.constant 1 : index
    %c0_3 = arith.constant 0 : index
    %c0_4 = arith.constant 0 : index
    %c0_5 = arith.constant 0 : index
    %2 = vector.load %arg3[%c1, %c0_3, %c0_4, %c0_5] : memref<3x2x8x128xf32, #tpu.memory_space<vmem>>, vector<1x2x8x128xf32>
    %3 = vector.shape_cast %2 : vector<1x2x8x128xf32> to vector<2x8x128xf32>
    %c2 = arith.constant 2 : index
    %c0_6 = arith.constant 0 : index
    %c0_7 = arith.constant 0 : index
    %c0_8 = arith.constant 0 : index
    %4 = vector.load %arg3[%c2, %c0_6, %c0_7, %c0_8] : memref<3x2x8x128xf32, #tpu.memory_space<vmem>>, vector<1x2x8x128xf32>
    %5 = vector.shape_cast %4 : vector<1x2x8x128xf32> to vector<2x8x128xf32>
    %6 = tpu.iota {dimensions = array<i32: 2>} : vector<1x1x128xi32>
    %c48_i32 = arith.constant 48 : i32
    %7 = vector.broadcast %c48_i32 : i32 to vector<1x1x128xi32>
    %8 = arith.cmpi slt, %6, %7 : vector<1x1x128xi32>
    %9 = arith.extui %8 : vector<1x1x128xi1> to vector<1x1x128xi32>
    %10 = arith.sitofp %9 : vector<1x1x128xi32> to vector<1x1x128xf32>
    %11 = vector.broadcast %10 : vector<1x1x128xf32> to vector<2x8x128xf32>
    %12 = arith.mulf %1, %11 : vector<2x8x128xf32>
    %cst = arith.constant dense<0.000000e+00> : vector<2x8xf32>
    %13 = vector.multi_reduction <add>, %12, %cst [2] : vector<2x8x128xf32> to vector<2x8xf32>
    %14 = vector.shape_cast %13 : vector<2x8xf32> to vector<2x8x1xf32>
    %cst_9 = arith.constant 0.020833334 : f32
    %15 = vector.broadcast %cst_9 : f32 to vector<2x8x1xf32>
    %16 = arith.mulf %14, %15 : vector<2x8x1xf32>
    %17 = vector.broadcast %10 : vector<1x1x128xf32> to vector<2x8x128xf32>
    %18 = arith.mulf %3, %17 : vector<2x8x128xf32>
    %cst_10 = arith.constant dense<0.000000e+00> : vector<2x8xf32>
    %19 = vector.multi_reduction <add>, %18, %cst_10 [2] : vector<2x8x128xf32> to vector<2x8xf32>
    %20 = vector.shape_cast %19 : vector<2x8xf32> to vector<2x8x1xf32>
    %cst_11 = arith.constant 0.020833334 : f32
    %21 = vector.broadcast %cst_11 : f32 to vector<2x8x1xf32>
    %22 = arith.mulf %20, %21 : vector<2x8x1xf32>
    %23 = vector.broadcast %10 : vector<1x1x128xf32> to vector<2x8x128xf32>
    %24 = arith.mulf %5, %23 : vector<2x8x128xf32>
    %cst_12 = arith.constant dense<0.000000e+00> : vector<2x8xf32>
    %25 = vector.multi_reduction <add>, %24, %cst_12 [2] : vector<2x8x128xf32> to vector<2x8xf32>
    %26 = vector.shape_cast %25 : vector<2x8xf32> to vector<2x8x1xf32>
    %cst_13 = arith.constant 0.020833334 : f32
    %27 = vector.broadcast %cst_13 : f32 to vector<2x8x1xf32>
    %28 = arith.mulf %26, %27 : vector<2x8x1xf32>
    %29 = vector.broadcast %16 : vector<2x8x1xf32> to vector<2x8x128xf32>
    %30 = arith.subf %1, %29 : vector<2x8x128xf32>
    %31 = vector.broadcast %10 : vector<1x1x128xf32> to vector<2x8x128xf32>
    %32 = arith.mulf %30, %31 : vector<2x8x128xf32>
    %33 = vector.broadcast %22 : vector<2x8x1xf32> to vector<2x8x128xf32>
    %34 = arith.subf %3, %33 : vector<2x8x128xf32>
    %35 = vector.broadcast %10 : vector<1x1x128xf32> to vector<2x8x128xf32>
    %36 = arith.mulf %34, %35 : vector<2x8x128xf32>
    %37 = vector.broadcast %28 : vector<2x8x1xf32> to vector<2x8x128xf32>
    %38 = arith.subf %5, %37 : vector<2x8x128xf32>
    %39 = vector.broadcast %10 : vector<1x1x128xf32> to vector<2x8x128xf32>
    %40 = arith.mulf %38, %39 : vector<2x8x128xf32>
    %41 = arith.mulf %32, %32 : vector<2x8x128xf32>
    %cst_14 = arith.constant dense<0.000000e+00> : vector<2x8xf32>
    %42 = vector.multi_reduction <add>, %41, %cst_14 [2] : vector<2x8x128xf32> to vector<2x8xf32>
    %43 = vector.shape_cast %42 : vector<2x8xf32> to vector<2x8x1xf32>
    %44 = arith.mulf %32, %36 : vector<2x8x128xf32>
    %cst_15 = arith.constant dense<0.000000e+00> : vector<2x8xf32>
    %45 = vector.multi_reduction <add>, %44, %cst_15 [2] : vector<2x8x128xf32> to vector<2x8xf32>
    %46 = vector.shape_cast %45 : vector<2x8xf32> to vector<2x8x1xf32>
    %47 = arith.mulf %32, %40 : vector<2x8x128xf32>
    %cst_16 = arith.constant dense<0.000000e+00> : vector<2x8xf32>
    %48 = vector.multi_reduction <add>, %47, %cst_16 [2] : vector<2x8x128xf32> to vector<2x8xf32>
    %49 = vector.shape_cast %48 : vector<2x8xf32> to vector<2x8x1xf32>
    %50 = arith.mulf %36, %36 : vector<2x8x128xf32>
    %cst_17 = arith.constant dense<0.000000e+00> : vector<2x8xf32>
    %51 = vector.multi_reduction <add>, %50, %cst_17 [2] : vector<2x8x128xf32> to vector<2x8xf32>
    %52 = vector.shape_cast %51 : vector<2x8xf32> to vector<2x8x1xf32>
    %53 = arith.mulf %36, %40 : vector<2x8x128xf32>
    %cst_18 = arith.constant dense<0.000000e+00> : vector<2x8xf32>
    %54 = vector.multi_reduction <add>, %53, %cst_18 [2] : vector<2x8x128xf32> to vector<2x8xf32>
    %55 = vector.shape_cast %54 : vector<2x8xf32> to vector<2x8x1xf32>
    %56 = arith.mulf %40, %40 : vector<2x8x128xf32>
    %cst_19 = arith.constant dense<0.000000e+00> : vector<2x8xf32>
    %57 = vector.multi_reduction <add>, %56, %cst_19 [2] : vector<2x8x128xf32> to vector<2x8xf32>
    %58 = vector.shape_cast %57 : vector<2x8xf32> to vector<2x8x1xf32>
    %59 = arith.addf %43, %52 : vector<2x8x1xf32>
    %60 = arith.addf %59, %58 : vector<2x8x1xf32>
    %cst_20 = arith.constant 9.99999997E-7 : f32
    %61 = vector.broadcast %cst_20 : f32 to vector<2x8x1xf32>
    %62 = arith.mulf %61, %60 : vector<2x8x1xf32>
    %cst_21 = arith.constant 9.99999996E-13 : f32
    %63 = vector.broadcast %cst_21 : f32 to vector<2x8x1xf32>
    %64 = arith.addf %62, %63 : vector<2x8x1xf32>
    %65 = arith.addf %43, %64 : vector<2x8x1xf32>
    %66 = arith.addf %52, %64 : vector<2x8x1xf32>
    %67 = arith.addf %58, %64 : vector<2x8x1xf32>
    %68 = arith.mulf %66, %67 : vector<2x8x1xf32>
    %69 = arith.mulf %55, %55 : vector<2x8x1xf32>
    %70 = arith.subf %68, %69 : vector<2x8x1xf32>
    %71 = arith.mulf %46, %67 : vector<2x8x1xf32>
    %72 = arith.mulf %55, %49 : vector<2x8x1xf32>
    %73 = arith.subf %71, %72 : vector<2x8x1xf32>
    %cst_22 = arith.constant 0.000000e+00 : f32
    %74 = vector.broadcast %cst_22 : f32 to vector<2x8x1xf32>
    %75 = arith.subf %74, %73 : vector<2x8x1xf32>
    %76 = arith.mulf %46, %55 : vector<2x8x1xf32>
    %77 = arith.mulf %66, %49 : vector<2x8x1xf32>
    %78 = arith.subf %76, %77 : vector<2x8x1xf32>
    %79 = arith.mulf %46, %67 : vector<2x8x1xf32>
    %80 = arith.mulf %49, %55 : vector<2x8x1xf32>
    %81 = arith.subf %79, %80 : vector<2x8x1xf32>
    %cst_23 = arith.constant 0.000000e+00 : f32
    %82 = vector.broadcast %cst_23 : f32 to vector<2x8x1xf32>
    %83 = arith.subf %82, %81 : vector<2x8x1xf32>
    %84 = arith.mulf %65, %67 : vector<2x8x1xf32>
    %85 = arith.mulf %49, %49 : vector<2x8x1xf32>
    %86 = arith.subf %84, %85 : vector<2x8x1xf32>
    %87 = arith.mulf %65, %55 : vector<2x8x1xf32>
    %88 = arith.mulf %46, %49 : vector<2x8x1xf32>
    %89 = arith.subf %87, %88 : vector<2x8x1xf32>
    %cst_24 = arith.constant 0.000000e+00 : f32
    %90 = vector.broadcast %cst_24 : f32 to vector<2x8x1xf32>
    %91 = arith.subf %90, %89 : vector<2x8x1xf32>
    %92 = arith.mulf %46, %55 : vector<2x8x1xf32>
    %93 = arith.mulf %49, %66 : vector<2x8x1xf32>
    %94 = arith.subf %92, %93 : vector<2x8x1xf32>
    %95 = arith.mulf %65, %55 : vector<2x8x1xf32>
    %96 = arith.mulf %49, %46 : vector<2x8x1xf32>
    %97 = arith.subf %95, %96 : vector<2x8x1xf32>
    %cst_25 = arith.constant 0.000000e+00 : f32
    %98 = vector.broadcast %cst_25 : f32 to vector<2x8x1xf32>
    %99 = arith.subf %98, %97 : vector<2x8x1xf32>
    %100 = arith.mulf %65, %66 : vector<2x8x1xf32>
    %101 = arith.mulf %46, %46 : vector<2x8x1xf32>
    %102 = arith.subf %100, %101 : vector<2x8x1xf32>
    %103 = arith.mulf %65, %70 : vector<2x8x1xf32>
    %104 = arith.mulf %46, %75 : vector<2x8x1xf32>
    %105 = arith.addf %103, %104 : vector<2x8x1xf32>
    %106 = arith.mulf %49, %78 : vector<2x8x1xf32>
    %107 = arith.addf %105, %106 : vector<2x8x1xf32>
    %108 = tpu.reciprocal %107 {approx = true} : vector<2x8x1xf32> -> vector<2x8x1xf32>
    %109 = arith.mulf %107, %108 : vector<2x8x1xf32>
    %cst_26 = arith.constant 2.000000e+00 : f32
    %110 = vector.broadcast %cst_26 : f32 to vector<2x8x1xf32>
    %111 = arith.subf %110, %109 : vector<2x8x1xf32>
    %112 = arith.mulf %108, %111 : vector<2x8x1xf32>
    %113 = arith.mulf %70, %112 : vector<2x8x1xf32>
    %114 = arith.mulf %83, %112 : vector<2x8x1xf32>
    %115 = arith.mulf %94, %112 : vector<2x8x1xf32>
    %116 = arith.mulf %75, %112 : vector<2x8x1xf32>
    %117 = arith.mulf %86, %112 : vector<2x8x1xf32>
    %118 = arith.mulf %99, %112 : vector<2x8x1xf32>
    %119 = arith.mulf %78, %112 : vector<2x8x1xf32>
    %120 = arith.mulf %91, %112 : vector<2x8x1xf32>
    %121 = arith.mulf %102, %112 : vector<2x8x1xf32>
    %c0_27 = arith.constant 0 : index
    %c0_28 = arith.constant 0 : index
    %122 = vector.load %arg1[%c0_27, %c0_28] : memref<3x128xf32, #tpu.memory_space<vmem>>, vector<3x128xf32>
    %123 = vector.extract_strided_slice %122 {offsets = [0, 0], sizes = [1, 128], strides = [1, 1]} : vector<3x128xf32> to vector<1x128xf32>
    %124 = vector.extract_strided_slice %122 {offsets = [1, 0], sizes = [1, 128], strides = [1, 1]} : vector<3x128xf32> to vector<1x128xf32>
    %125 = vector.extract_strided_slice %122 {offsets = [2, 0], sizes = [1, 128], strides = [1, 1]} : vector<3x128xf32> to vector<1x128xf32>
    %126 = vector.shape_cast %123 : vector<1x128xf32> to vector<1x1x128xf32>
    %127 = vector.broadcast %126 : vector<1x1x128xf32> to vector<2x8x128xf32>
    %128 = arith.mulf %127, %32 : vector<2x8x128xf32>
    %cst_29 = arith.constant dense<0.000000e+00> : vector<2x8xf32>
    %129 = vector.multi_reduction <add>, %128, %cst_29 [2] : vector<2x8x128xf32> to vector<2x8xf32>
    %130 = vector.shape_cast %129 : vector<2x8xf32> to vector<2x8x1xf32>
    %131 = vector.shape_cast %123 : vector<1x128xf32> to vector<1x1x128xf32>
    %132 = vector.broadcast %131 : vector<1x1x128xf32> to vector<2x8x128xf32>
    %133 = arith.mulf %132, %36 : vector<2x8x128xf32>
    %cst_30 = arith.constant dense<0.000000e+00> : vector<2x8xf32>
    %134 = vector.multi_reduction <add>, %133, %cst_30 [2] : vector<2x8x128xf32> to vector<2x8xf32>
    %135 = vector.shape_cast %134 : vector<2x8xf32> to vector<2x8x1xf32>
    %136 = vector.shape_cast %123 : vector<1x128xf32> to vector<1x1x128xf32>
    %137 = vector.broadcast %136 : vector<1x1x128xf32> to vector<2x8x128xf32>
    %138 = arith.mulf %137, %40 : vector<2x8x128xf32>
    %cst_31 = arith.constant dense<0.000000e+00> : vector<2x8xf32>
    %139 = vector.multi_reduction <add>, %138, %cst_31 [2] : vector<2x8x128xf32> to vector<2x8xf32>
    %140 = vector.shape_cast %139 : vector<2x8xf32> to vector<2x8x1xf32>
    %141 = vector.shape_cast %124 : vector<1x128xf32> to vector<1x1x128xf32>
    %142 = vector.broadcast %141 : vector<1x1x128xf32> to vector<2x8x128xf32>
    %143 = arith.mulf %142, %32 : vector<2x8x128xf32>
    %cst_32 = arith.constant dense<0.000000e+00> : vector<2x8xf32>
    %144 = vector.multi_reduction <add>, %143, %cst_32 [2] : vector<2x8x128xf32> to vector<2x8xf32>
    %145 = vector.shape_cast %144 : vector<2x8xf32> to vector<2x8x1xf32>
    %146 = vector.shape_cast %124 : vector<1x128xf32> to vector<1x1x128xf32>
    %147 = vector.broadcast %146 : vector<1x1x128xf32> to vector<2x8x128xf32>
    %148 = arith.mulf %147, %36 : vector<2x8x128xf32>
    %cst_33 = arith.constant dense<0.000000e+00> : vector<2x8xf32>
    %149 = vector.multi_reduction <add>, %148, %cst_33 [2] : vector<2x8x128xf32> to vector<2x8xf32>
    %150 = vector.shape_cast %149 : vector<2x8xf32> to vector<2x8x1xf32>
    %151 = vector.shape_cast %124 : vector<1x128xf32> to vector<1x1x128xf32>
    %152 = vector.broadcast %151 : vector<1x1x128xf32> to vector<2x8x128xf32>
    %153 = arith.mulf %152, %40 : vector<2x8x128xf32>
    %cst_34 = arith.constant dense<0.000000e+00> : vector<2x8xf32>
    %154 = vector.multi_reduction <add>, %153, %cst_34 [2] : vector<2x8x128xf32> to vector<2x8xf32>
    %155 = vector.shape_cast %154 : vector<2x8xf32> to vector<2x8x1xf32>
    %156 = vector.shape_cast %125 : vector<1x128xf32> to vector<1x1x128xf32>
    %157 = vector.broadcast %156 : vector<1x1x128xf32> to vector<2x8x128xf32>
    %158 = arith.mulf %157, %32 : vector<2x8x128xf32>
    %cst_35 = arith.constant dense<0.000000e+00> : vector<2x8xf32>
    %159 = vector.multi_reduction <add>, %158, %cst_35 [2] : vector<2x8x128xf32> to vector<2x8xf32>
    %160 = vector.shape_cast %159 : vector<2x8xf32> to vector<2x8x1xf32>
    %161 = vector.shape_cast %125 : vector<1x128xf32> to vector<1x1x128xf32>
    %162 = vector.broadcast %161 : vector<1x1x128xf32> to vector<2x8x128xf32>
    %163 = arith.mulf %162, %36 : vector<2x8x128xf32>
    %cst_36 = arith.constant dense<0.000000e+00> : vector<2x8xf32>
    %164 = vector.multi_reduction <add>, %163, %cst_36 [2] : vector<2x8x128xf32> to vector<2x8xf32>
    %165 = vector.shape_cast %164 : vector<2x8xf32> to vector<2x8x1xf32>
    %166 = vector.shape_cast %125 : vector<1x128xf32> to vector<1x1x128xf32>
    %167 = vector.broadcast %166 : vector<1x1x128xf32> to vector<2x8x128xf32>
    %168 = arith.mulf %167, %40 : vector<2x8x128xf32>
    %cst_37 = arith.constant dense<0.000000e+00> : vector<2x8xf32>
    %169 = vector.multi_reduction <add>, %168, %cst_37 [2] : vector<2x8x128xf32> to vector<2x8xf32>
    %170 = vector.shape_cast %169 : vector<2x8xf32> to vector<2x8x1xf32>
    %171 = arith.mulf %130, %113 : vector<2x8x1xf32>
    %172 = arith.mulf %135, %116 : vector<2x8x1xf32>
    %173 = arith.addf %171, %172 : vector<2x8x1xf32>
    %174 = arith.mulf %140, %119 : vector<2x8x1xf32>
    %175 = arith.addf %173, %174 : vector<2x8x1xf32>
    %176 = arith.mulf %130, %114 : vector<2x8x1xf32>
    %177 = arith.mulf %135, %117 : vector<2x8x1xf32>
    %178 = arith.addf %176, %177 : vector<2x8x1xf32>
    %179 = arith.mulf %140, %120 : vector<2x8x1xf32>
    %180 = arith.addf %178, %179 : vector<2x8x1xf32>
    %181 = arith.mulf %130, %115 : vector<2x8x1xf32>
    %182 = arith.mulf %135, %118 : vector<2x8x1xf32>
    %183 = arith.addf %181, %182 : vector<2x8x1xf32>
    %184 = arith.mulf %140, %121 : vector<2x8x1xf32>
    %185 = arith.addf %183, %184 : vector<2x8x1xf32>
    %186 = arith.mulf %145, %113 : vector<2x8x1xf32>
    %187 = arith.mulf %150, %116 : vector<2x8x1xf32>
    %188 = arith.addf %186, %187 : vector<2x8x1xf32>
    %189 = arith.mulf %155, %119 : vector<2x8x1xf32>
    %190 = arith.addf %188, %189 : vector<2x8x1xf32>
    %191 = arith.mulf %145, %114 : vector<2x8x1xf32>
    %192 = arith.mulf %150, %117 : vector<2x8x1xf32>
    %193 = arith.addf %191, %192 : vector<2x8x1xf32>
    %194 = arith.mulf %155, %120 : vector<2x8x1xf32>
    %195 = arith.addf %193, %194 : vector<2x8x1xf32>
    %196 = arith.mulf %145, %115 : vector<2x8x1xf32>
    %197 = arith.mulf %150, %118 : vector<2x8x1xf32>
    %198 = arith.addf %196, %197 : vector<2x8x1xf32>
    %199 = arith.mulf %155, %121 : vector<2x8x1xf32>
    %200 = arith.addf %198, %199 : vector<2x8x1xf32>
    %201 = arith.mulf %160, %113 : vector<2x8x1xf32>
    %202 = arith.mulf %165, %116 : vector<2x8x1xf32>
    %203 = arith.addf %201, %202 : vector<2x8x1xf32>
    %204 = arith.mulf %170, %119 : vector<2x8x1xf32>
    %205 = arith.addf %203, %204 : vector<2x8x1xf32>
    %206 = arith.mulf %160, %114 : vector<2x8x1xf32>
    %207 = arith.mulf %165, %117 : vector<2x8x1xf32>
    %208 = arith.addf %206, %207 : vector<2x8x1xf32>
    %209 = arith.mulf %170, %120 : vector<2x8x1xf32>
    %210 = arith.addf %208, %209 : vector<2x8x1xf32>
    %211 = arith.mulf %160, %115 : vector<2x8x1xf32>
    %212 = arith.mulf %165, %118 : vector<2x8x1xf32>
    %213 = arith.addf %211, %212 : vector<2x8x1xf32>
    %214 = arith.mulf %170, %121 : vector<2x8x1xf32>
    %215 = arith.addf %213, %214 : vector<2x8x1xf32>
    %216 = vector.broadcast %16 : vector<2x8x1xf32> to vector<2x8x128xf32>
    %217 = arith.subf %1, %216 : vector<2x8x128xf32>
    %218 = vector.broadcast %22 : vector<2x8x1xf32> to vector<2x8x128xf32>
    %219 = arith.subf %3, %218 : vector<2x8x128xf32>
    %220 = vector.broadcast %28 : vector<2x8x1xf32> to vector<2x8x128xf32>
    %221 = arith.subf %5, %220 : vector<2x8x128xf32>
    %c0_38 = arith.constant 0 : index
    %c0_39 = arith.constant 0 : index
    %222 = vector.load %arg2[%c0_38, %c0_39] : memref<3x128xf32, #tpu.memory_space<vmem>>, vector<3x128xf32>
    %223 = vector.extract_strided_slice %222 {offsets = [0, 0], sizes = [1, 128], strides = [1, 1]} : vector<3x128xf32> to vector<1x128xf32>
    %224 = vector.extract_strided_slice %222 {offsets = [1, 0], sizes = [1, 128], strides = [1, 1]} : vector<3x128xf32> to vector<1x128xf32>
    %225 = vector.extract_strided_slice %222 {offsets = [2, 0], sizes = [1, 128], strides = [1, 1]} : vector<3x128xf32> to vector<1x128xf32>
    %226 = vector.broadcast %175 : vector<2x8x1xf32> to vector<2x8x128xf32>
    %227 = arith.mulf %226, %217 : vector<2x8x128xf32>
    %228 = vector.broadcast %180 : vector<2x8x1xf32> to vector<2x8x128xf32>
    %229 = arith.mulf %228, %219 : vector<2x8x128xf32>
    %230 = arith.addf %227, %229 : vector<2x8x128xf32>
    %231 = vector.broadcast %185 : vector<2x8x1xf32> to vector<2x8x128xf32>
    %232 = arith.mulf %231, %221 : vector<2x8x128xf32>
    %233 = arith.addf %230, %232 : vector<2x8x128xf32>
    %234 = vector.shape_cast %223 : vector<1x128xf32> to vector<1x1x128xf32>
    %235 = vector.broadcast %234 : vector<1x1x128xf32> to vector<2x8x128xf32>
    %236 = arith.addf %233, %235 : vector<2x8x128xf32>
    %c0_40 = arith.constant 0 : index
    %c0_41 = arith.constant 0 : index
    %c0_42 = arith.constant 0 : index
    %c0_43 = arith.constant 0 : index
    %237 = vector.load %arg4[%c0_40, %c0_41, %c0_42, %c0_43] : memref<3x2x8x128xf32, #tpu.memory_space<vmem>>, vector<1x2x8x128xf32>
    %238 = vector.shape_cast %237 : vector<1x2x8x128xf32> to vector<2x8x128xf32>
    %239 = vector.shape_cast %236 : vector<2x8x128xf32> to vector<1x2x8x128xf32>
    tpu.vector_store %arg4[%c0_40, %c0_41, %c0_42, %c0_43], %239 {strides = array<i32>} : memref<3x2x8x128xf32, #tpu.memory_space<vmem>>, vector<1x2x8x128xf32>,
    %240 = vector.broadcast %190 : vector<2x8x1xf32> to vector<2x8x128xf32>
    %241 = arith.mulf %240, %217 : vector<2x8x128xf32>
    %242 = vector.broadcast %195 : vector<2x8x1xf32> to vector<2x8x128xf32>
    %243 = arith.mulf %242, %219 : vector<2x8x128xf32>
    %244 = arith.addf %241, %243 : vector<2x8x128xf32>
    %245 = vector.broadcast %200 : vector<2x8x1xf32> to vector<2x8x128xf32>
    %246 = arith.mulf %245, %221 : vector<2x8x128xf32>
    %247 = arith.addf %244, %246 : vector<2x8x128xf32>
    %248 = vector.shape_cast %224 : vector<1x128xf32> to vector<1x1x128xf32>
    %249 = vector.broadcast %248 : vector<1x1x128xf32> to vector<2x8x128xf32>
    %250 = arith.addf %247, %249 : vector<2x8x128xf32>
    %c1_44 = arith.constant 1 : index
    %c0_45 = arith.constant 0 : index
    %c0_46 = arith.constant 0 : index
    %c0_47 = arith.constant 0 : index
    %251 = vector.load %arg4[%c1_44, %c0_45, %c0_46, %c0_47] : memref<3x2x8x128xf32, #tpu.memory_space<vmem>>, vector<1x2x8x128xf32>
    %252 = vector.shape_cast %251 : vector<1x2x8x128xf32> to vector<2x8x128xf32>
    %253 = vector.shape_cast %250 : vector<2x8x128xf32> to vector<1x2x8x128xf32>
    tpu.vector_store %arg4[%c1_44, %c0_45, %c0_46, %c0_47], %253 {strides = array<i32>} : memref<3x2x8x128xf32, #tpu.memory_space<vmem>>, vector<1x2x8x128xf32>,
    %254 = vector.broadcast %205 : vector<2x8x1xf32> to vector<2x8x128xf32>
    %255 = arith.mulf %254, %217 : vector<2x8x128xf32>
    %256 = vector.broadcast %210 : vector<2x8x1xf32> to vector<2x8x128xf32>
    %257 = arith.mulf %256, %219 : vector<2x8x128xf32>
    %258 = arith.addf %255, %257 : vector<2x8x128xf32>
    %259 = vector.broadcast %215 : vector<2x8x1xf32> to vector<2x8x128xf32>
    %260 = arith.mulf %259, %221 : vector<2x8x128xf32>
    %261 = arith.addf %258, %260 : vector<2x8x128xf32>
    %262 = vector.shape_cast %225 : vector<1x128xf32> to vector<1x1x128xf32>
    %263 = vector.broadcast %262 : vector<1x1x128xf32> to vector<2x8x128xf32>
    %264 = arith.addf %261, %263 : vector<2x8x128xf32>
    %c2_48 = arith.constant 2 : index
    %c0_49 = arith.constant 0 : index
    %c0_50 = arith.constant 0 : index
    %c0_51 = arith.constant 0 : index
    %265 = vector.load %arg4[%c2_48, %c0_49, %c0_50, %c0_51] : memref<3x2x8x128xf32, #tpu.memory_space<vmem>>, vector<1x2x8x128xf32>
    %266 = vector.shape_cast %265 : vector<1x2x8x128xf32> to vector<2x8x128xf32>
    %267 = vector.shape_cast %264 : vector<2x8x128xf32> to vector<1x2x8x128xf32>
    tpu.vector_store %arg4[%c2_48, %c0_49, %c0_50, %c0_51], %267 {strides = array<i32>} : memref<3x2x8x128xf32, #tpu.memory_space<vmem>>, vector<1x2x8x128xf32>,
    return
  }
  func.func @transform_0(%arg0: i32) -> (i32, i32) {
    %c0_i32 = arith.constant 0 : i32
    %c0_i32_0 = arith.constant 0 : i32
    %c0_i32_1 = arith.constant 0 : i32
    return %c0_i32, %c0_i32_0 : i32, i32
  }
  func.func @transform_1(%arg0: i32) -> (i32, i32) {
    %c0_i32 = arith.constant 0 : i32
    %c0_i32_0 = arith.constant 0 : i32
    %c0_i32_1 = arith.constant 0 : i32
    return %c0_i32, %c0_i32_0 : i32, i32
  }
  func.func @transform_2(%arg0: i32) -> (i32, i32, i32, i32) {
    %c0_i32 = arith.constant 0 : i32
    %c0_i32_0 = arith.constant 0 : i32
    %c0_i32_1 = arith.constant 0 : i32
    %c0_i32_2 = arith.constant 0 : i32
    return %c0_i32, %c0_i32_0, %arg0, %c0_i32_1 : i32, i32, i32, i32
  }
  func.func @transform_3(%arg0: i32) -> (i32, i32, i32, i32) {
    %c0_i32 = arith.constant 0 : i32
    %c0_i32_0 = arith.constant 0 : i32
    %c0_i32_1 = arith.constant 0 : i32
    %c0_i32_2 = arith.constant 0 : i32
    return %c0_i32, %c0_i32_0, %arg0, %c0_i32_1 : i32, i32, i32, i32
  }
}

module attributes {stable_mosaic.version = 11 : i64} {
  func.func @_scale_kernel(%arg0: i32, %arg1: memref<1x1xf32, #tpu.memory_space<smem>>, %arg2: memref<4x1024xf32, #tpu.memory_space<vmem>>, %arg3: memref<4x1024xf32, #tpu.memory_space<vmem>>) attributes {dimension_semantics = [#tpu.dimension_semantics<parallel>], iteration_bounds = array<i64: 1>, scalar_prefetch = 0 : i64, scratch_operands = 0 : i64, tpu.core_type = #tpu.core_type<tc>, window_params = [{transform_indices = @transform_0, window_bounds = array<i64: 1, 1>}, {transform_indices = @transform_1, window_bounds = array<i64: 4, 1024>}, {transform_indices = @transform_2, window_bounds = array<i64: 4, 1024>}]} {
    %c0 = arith.constant 0 : index
    %c0_0 = arith.constant 0 : index
    %0 = memref.load %arg1[%c0, %c0_0] : memref<1x1xf32, #tpu.memory_space<smem>>
    %cst = arith.constant 1.000000e-30 : f32
    %1 = arith.maximumf %0, %cst : f32
    %cst_1 = arith.constant 1.000000e+00 : f32
    %2 = arith.divf %cst_1, %1 : f32
    %c0_2 = arith.constant 0 : index
    %c0_3 = arith.constant 0 : index
    %3 = vector.load %arg2[%c0_2, %c0_3] : memref<4x1024xf32, #tpu.memory_space<vmem>>, vector<4x1024xf32>
    %4 = vector.broadcast %2 : f32 to vector<4x1024xf32>
    %5 = arith.mulf %3, %4 : vector<4x1024xf32>
    %c0_4 = arith.constant 0 : index
    %c0_5 = arith.constant 0 : index
    %6 = vector.load %arg3[%c0_4, %c0_5] : memref<4x1024xf32, #tpu.memory_space<vmem>>, vector<4x1024xf32>
    tpu.vector_store %arg3[%c0_4, %c0_5], %5 {strides = array<i32>} : memref<4x1024xf32, #tpu.memory_space<vmem>>, vector<4x1024xf32>,
    return
  }
  func.func @transform_0(%arg0: i32) -> (i32, i32) {
    %c0_i32 = arith.constant 0 : i32
    %c0_i32_0 = arith.constant 0 : i32
    %c0_i32_1 = arith.constant 0 : i32
    return %c0_i32, %c0_i32_0 : i32, i32
  }
  func.func @transform_1(%arg0: i32) -> (i32, i32) {
    %c0_i32 = arith.constant 0 : i32
    %c0_i32_0 = arith.constant 0 : i32
    return %arg0, %c0_i32 : i32, i32
  }
  func.func @transform_2(%arg0: i32) -> (i32, i32) {
    %c0_i32 = arith.constant 0 : i32
    %c0_i32_0 = arith.constant 0 : i32
    return %arg0, %c0_i32 : i32, i32
  }
}

module attributes {stable_mosaic.version = 11 : i64} {
  func.func @_absmax_kernel(%arg0: i32, %arg1: memref<4x1024xf32, #tpu.memory_space<vmem>>, %arg2: memref<1x1xf32, #tpu.memory_space<vmem>>) attributes {dimension_semantics = [#tpu.dimension_semantics<arbitrary>], iteration_bounds = array<i64: 1>, scalar_prefetch = 0 : i64, scratch_operands = 0 : i64, tpu.core_type = #tpu.core_type<tc>, window_params = [{transform_indices = @transform_0, window_bounds = array<i64: 4, 1024>}, {pipeline_mode = #tpu.pipeline_mode<synchronous>, transform_indices = @transform_1, window_bounds = array<i64: 1, 1>}]} {
    %c0 = arith.constant 0 : index
    %c0_0 = arith.constant 0 : index
    %0 = vector.load %arg1[%c0, %c0_0] : memref<4x1024xf32, #tpu.memory_space<vmem>>, vector<4x1024xf32>
    %1 = math.absf %0 : vector<4x1024xf32>
    %cst = arith.constant dense<0xFF800000> : vector<4xf32>
    %2 = vector.multi_reduction <maximumf>, %1, %cst [1] : vector<4x1024xf32> to vector<4xf32>
    %3 = vector.shape_cast %2 : vector<4xf32> to vector<4x1xf32>
    %cst_1 = arith.constant dense<0xFF800000> : vector<1xf32>
    %4 = vector.multi_reduction <maximumf>, %3, %cst_1 [0] : vector<4x1xf32> to vector<1xf32>
    %5 = vector.shape_cast %4 : vector<1xf32> to vector<1x1xf32>
    %c0_i32 = arith.constant 0 : i32
    %6 = arith.cmpi eq, %arg0, %c0_i32 : i32
    %7 = arith.extui %6 : i1 to i32
    %c0_i32_2 = arith.constant 0 : i32
    %8 = arith.cmpi ne, %7, %c0_i32_2 : i32
    scf.if %8 {
      %cst_7 = arith.constant 0.000000e+00 : f32
      %12 = vector.broadcast %cst_7 : f32 to vector<1x1xf32>
      %c0_8 = arith.constant 0 : index
      %c0_9 = arith.constant 0 : index
      %13 = vector.load %arg2[%c0_8, %c0_9] : memref<1x1xf32, #tpu.memory_space<vmem>>, vector<1x1xf32>
      tpu.vector_store %arg2[%c0_8, %c0_9], %12 {strides = array<i32>} : memref<1x1xf32, #tpu.memory_space<vmem>>, vector<1x1xf32>,
    } else {
    }
    %c0_3 = arith.constant 0 : index
    %c0_4 = arith.constant 0 : index
    %9 = vector.load %arg2[%c0_3, %c0_4] : memref<1x1xf32, #tpu.memory_space<vmem>>, vector<1x1xf32>
    %10 = arith.maximumf %9, %5 : vector<1x1xf32>
    %c0_5 = arith.constant 0 : index
    %c0_6 = arith.constant 0 : index
    %11 = vector.load %arg2[%c0_5, %c0_6] : memref<1x1xf32, #tpu.memory_space<vmem>>, vector<1x1xf32>
    tpu.vector_store %arg2[%c0_5, %c0_6], %10 {strides = array<i32>} : memref<1x1xf32, #tpu.memory_space<vmem>>, vector<1x1xf32>,
    return
  }
  func.func @transform_0(%arg0: i32) -> (i32, i32) {
    %c0_i32 = arith.constant 0 : i32
    %c0_i32_0 = arith.constant 0 : i32
    return %arg0, %c0_i32 : i32, i32
  }
  func.func @transform_1(%arg0: i32) -> (i32, i32) {
    %c0_i32 = arith.constant 0 : i32
    %c0_i32_0 = arith.constant 0 : i32
    %c0_i32_1 = arith.constant 0 : i32
    return %c0_i32, %c0_i32_0 : i32, i32
  }
}

</mosaic_0001>

<llo_original>
// kernel: speech_vovit_forward.4
$region0: #{speech_vovit_forward.4}
  #allocation0 [shape = 'u32[]', space=smem, size = 0x4, offset = 0x4, fixed_abs, tag = 'smem constant byte address 0x4 - core index']
  #allocation1 [shape = 'u32[144,128]{1,0:T(1,128)}', space=vmem, size = 0x12000, scoped, tag = 'internal scratch']
  %s0 = inlined_call_operand.vmem [shape: f32[4,1024], index: 0, kind: input, shape index: {}]
  %s1 = inlined_call_operand.hbm [shape: f32[1,1], index: 1, kind: output, shape index: {}]
  %s2 = sld [smem:[#allocation0]]
  $region18: #{speech_vovit_forward.4} parent=0
    _
  %s4 = ssub.s32 1, %s2
  %s5 = scalar_select 0, %s4, %s2
  $region1: #{speech_vovit_forward.4} parent=0
    #allocation2 [shape = 'u8[512]{0}', space=vmem, size = 0x400, scoped, tag = 'output window, operand 0, single buffered']
    #allocation3 [shape = 's32[1]{0}', space=sflag, size = 0x4, scoped, tag = 'scoped memory for speech_vovit_forward.4']
    %6 = vsyncpa [#allocation3], 0
    // Predicated region
    $region2: #{speech_vovit_forward.4} parent=1 // pred_check
      _
    $region3: #{speech_vovit_forward.4} parent=1 // pred_check_branch
      %8 = sbr.rel (0) target = $region5
    $region4: #{speech_vovit_forward.4} parent=1 // pred_region
      _
    $region5: #{speech_vovit_forward.4} parent=1 // pred_fallthru
      _
    %v9 = vld [vmem:[%s0] sm:$0xff]
    %v10 = vld [vmem:[%s0 + $0x8] sm:$0xff]
    %v11 = vld [vmem:[%s0 + $0x10] sm:$0xff]
    %v12 = vld [vmem:[%s0 + $0x18] sm:$0xff]
    %v13 = vand.u32 2147483647, %v9
    %v14 = vand.u32 2147483647, %v10
    %v15 = vand.u32 2147483647, %v11
    %v16 = vand.u32 2147483647, %v12
    %v21 = vcombine.high %v13, %v13
    %v22 = vcombine.high %v14, %v14
    %v23 = vcombine.high %v15, %v15
    %v24 = vcombine.high %v16, %v16
    %vm29 = vcmask 1043456
    %v30 = vsel %vm29, %v13, -inf
    %v31 = vsel %vm29, %v21, -inf
    %v32 = vsel %vm29, %v14, -inf
    %v33 = vsel %vm29, %v22, -inf
    %v34 = vsel %vm29, %v15, -inf
    %v35 = vmax.f32 %v30, %v34
    %v36 = vsel %vm29, %v23, -inf
    %v37 = vmax.f32 %v31, %v36
    %v38 = vsel %vm29, %v16, -inf
    %v39 = vmax.f32 %v32, %v38
    %v40 = vsel %vm29, %v24, -inf
    %v41 = vmax.f32 %v33, %v40
    %v42 = vmax.f32 %v35, %v37
    %v43 = vmax.f32 %v39, %v41
    %v44 = vmax.f32 %v42, %v43
    %45 = vmax.xlane.f32.xlu0 %v44
    %v46 = vpop.xlane.xlu0 %45
    %v47 = vsel %vm29, %v46, -inf
    %v48 = vrot.slane %v47, 4
    %v49 = vmax.f32 %v47, %v48
    %v50 = vrot.slane %v49, 2
    %v51 = vmax.f32 %v49, %v50
    %v52 = vrot.slane %v51, 1
    %v53 = vmax.f32 %v51, %v52
    %p54 = scmp.eq.s32.totalorder 0, 0
    // Predicated region
    $region6: #{speech_vovit_forward.4} parent=1 // pred_check
      %p55 = pneg %p54
    $region7: #{speech_vovit_forward.4} parent=1 // pred_check_branch
      %57 = sbr.rel (%p55) target = $region9
    $region8: #{speech_vovit_forward.4} parent=1 // pred_region
      %vm58 = vcmask 0
      %59 = vst.msk [vmem:[#allocation2] sm:$0x1] %vm58, 0.0
    $region9: #{speech_vovit_forward.4} parent=1 // pred_fallthru
      _
    %v60 = vld [vmem:[#allocation2] sm:$0x1]
    %v61 = vmax.f32 %v60, %v53
    %vm62 = vcmask 0
    %63 = vst.msk [vmem:[#allocation2] sm:$0x1] %vm62, %v61
    // Predicated region
    $region10: #{speech_vovit_forward.4} parent=1 // pred_check
      _
    $region11: #{speech_vovit_forward.4} parent=1 // pred_check_branch
      %65 = sbr.rel (0) target = $region13
    $region12: #{speech_vovit_forward.4} parent=1 // pred_region
      %s67 = ssub.s32 16, 16
      %68 = vsyncadd [#allocation3], %s67
      %s70 = sshll.u32 [#allocation2], 4
      %s71 = int_to_ptr.vmem [resolvable:$true] %s70
      %73 = dma.vmem_to_hbm [thread:$0]  %s71, 16, %s1, [#allocation3]
    $region13: #{speech_vovit_forward.4} parent=1 // pred_fallthru
      _
    // Predicated region
    $region14: #{speech_vovit_forward.4} parent=1 // pred_check
      _
    $region15: #{speech_vovit_forward.4} parent=1 // pred_check_branch
      %75 = sbr.rel (0) target = $region17
    $region16: #{speech_vovit_forward.4} parent=1 // pred_region
      %76 = dma.done [#allocation3], 16
    $region17: #{speech_vovit_forward.4} parent=1 // pred_fallthru
      _
    %77 = vsyncpa [#allocation3], 1

// kernel: speech_vovit_forward.5
$region0: #{speech_vovit_forward.5}
  #allocation0 [shape = 'u32[]', space=smem, size = 0x4, offset = 0x4, fixed_abs, tag = 'smem constant byte address 0x4 - core index']
  #allocation1 [shape = 'u32[144,128]{1,0:T(1,128)}', space=vmem, size = 0x12000, scoped, tag = 'internal scratch']
  #allocation2 [shape = 'f32[1,1]{1,0:T(1,128)S(6)}', space=smem, size = 0x200, scoped, tag = 'scoped memory for speech_vovit_forward.5']
  %s0 = inlined_call_operand.<no memory space> [shape: f32[1,1], index: 0, kind: input, shape index: {}]
  %s1 = inlined_call_operand.vmem [shape: f32[4,1024], index: 1, kind: input, shape index: {}, may-alias: {1,2}]
  %s2 = inlined_call_operand.vmem [shape: f32[4,1024], index: 2, kind: output, shape index: {}, may-alias: {1,2}]
  %s3 = sld [smem:[#allocation0]]
  $region18: #{speech_vovit_forward.5} parent=0
    _
  %s5 = ssub.s32 1, %s3
  %s6 = scalar_select 0, %s5, %s3
  %7 = sst [smem:[#allocation2]] %s0
  // Predicated region
  $region2: #{speech_vovit_forward.5} parent=0 // pred_check
    _
  $region3: #{speech_vovit_forward.5} parent=0 // pred_check_branch
    %9 = sbr.rel (0) target = $region5
  $region4: #{speech_vovit_forward.5} parent=0 // pred_region
    _
  $region5: #{speech_vovit_forward.5} parent=0 // pred_fallthru
    _
  // Predicated region
  $region6: #{speech_vovit_forward.5} parent=0 // pred_check
    _
  $region7: #{speech_vovit_forward.5} parent=0 // pred_check_branch
    %11 = sbr.rel (0) target = $region9
  $region8: #{speech_vovit_forward.5} parent=0 // pred_region
    _
  $region9: #{speech_vovit_forward.5} parent=0 // pred_fallthru
    _
  %s12 = sld [smem:[#allocation2]]
  %s13 = smax.f32 %s12, 1e-30
  %v14 = vstv %s13
  %v15 = vrcp.pop %v14
  %s16 = vtos %v15
  %v17 = vld [vmem:[%s1] sm:$0xff]
  %v18 = vld [vmem:[%s1 + $0x8] sm:$0xff]
  %v19 = vld [vmem:[%s1 + $0x10] sm:$0xff]
  %v20 = vld [vmem:[%s1 + $0x18] sm:$0xff]
  %v21 = vstv %s16
  %v22 = vmul.f32 %v17, %v21
  %v23 = vmul.f32 %v18, %v21
  %v24 = vmul.f32 %v19, %v21
  %v25 = vmul.f32 %v20, %v21
  %26 = vst [vmem:[%s2] sm:$0xff] %v22
  %27 = vst [vmem:[%s2 + $0x8] sm:$0xff] %v23
  %28 = vst [vmem:[%s2 + $0x10] sm:$0xff] %v24
  %29 = vst [vmem:[%s2 + $0x18] sm:$0xff] %v25
  // Predicated region
  $region10: #{speech_vovit_forward.5} parent=0 // pred_check
    _
  $region11: #{speech_vovit_forward.5} parent=0 // pred_check_branch
    %31 = sbr.rel (0) target = $region13
  $region12: #{speech_vovit_forward.5} parent=0 // pred_region
    _
  $region13: #{speech_vovit_forward.5} parent=0 // pred_fallthru
    _
  // Predicated region
  $region14: #{speech_vovit_forward.5} parent=0 // pred_check
    _
  $region15: #{speech_vovit_forward.5} parent=0 // pred_check_branch
    %33 = sbr.rel (0) target = $region17
  $region16: #{speech_vovit_forward.5} parent=0 // pred_region
    _
  $region17: #{speech_vovit_forward.5} parent=0 // pred_fallthru
    _

// kernel: speech_vovit_forward.3
$region0: #{speech_vovit_forward.3}
  #allocation0 [shape = 'u32[]', space=smem, size = 0x4, offset = 0x4, fixed_abs, tag = 'smem constant byte address 0x4 - core index']
  #allocation1 [shape = 'u32[144,128]{1,0:T(1,128)}', space=vmem, size = 0x12000, scoped, tag = 'internal scratch']
  %s0 = inlined_call_operand.vmem [shape: f32[3,128], index: 0, kind: input, shape index: {}]
  %s1 = inlined_call_operand.vmem [shape: f32[3,128], index: 1, kind: input, shape index: {}]
  %s2 = inlined_call_operand.vmem [shape: f32[3,2,8,128], index: 2, kind: input, shape index: {}]
  %s3 = inlined_call_operand.vmem [shape: f32[3,2,8,128], index: 3, kind: output, shape index: {}]
  %s4 = sld [smem:[#allocation0]]
  $region22: #{speech_vovit_forward.3} parent=0
    _
  %s6 = ssub.s32 1, %s4
  %s7 = scalar_select 0, %s6, %s4
  // Predicated region
  $region2: #{speech_vovit_forward.3} parent=0 // pred_check
    _
  $region3: #{speech_vovit_forward.3} parent=0 // pred_check_branch
    %9 = sbr.rel (0) target = $region5
  $region4: #{speech_vovit_forward.3} parent=0 // pred_region
    _
  $region5: #{speech_vovit_forward.3} parent=0 // pred_fallthru
    _
  // Predicated region
  $region6: #{speech_vovit_forward.3} parent=0 // pred_check
    _
  $region7: #{speech_vovit_forward.3} parent=0 // pred_check_branch
    %11 = sbr.rel (0) target = $region9
  $region8: #{speech_vovit_forward.3} parent=0 // pred_region
    _
  $region9: #{speech_vovit_forward.3} parent=0 // pred_fallthru
    _
  // Predicated region
  $region10: #{speech_vovit_forward.3} parent=0 // pred_check
    _
  $region11: #{speech_vovit_forward.3} parent=0 // pred_check_branch
    %13 = sbr.rel (0) target = $region13
  $region12: #{speech_vovit_forward.3} parent=0 // pred_region
    _
  $region13: #{speech_vovit_forward.3} parent=0 // pred_fallthru
    _
  %v14 = vld [vmem:[%s2] sm:$0xff]
  %v15 = vld [vmem:[%s2 + $0x8] sm:$0xff]
  %s16 = scalar_lea.vmem %s2, 16
  %v17 = vld [vmem:[%s16] sm:$0xff]
  %v18 = vld [vmem:[%s16 + $0x8] sm:$0xff]
  %s19 = scalar_lea.vmem %s2, 32
  %v20 = vld [vmem:[%s19] sm:$0xff]
  %v21 = vld [vmem:[%s19 + $0x8] sm:$0xff]
  %v22 = vlaneseq
  %v23 = vand.u32 %v22, 127
  %vm24 = vcmp.lt.s32.totalorder %v23, 48
  %v25 = vsel %vm24, 1, 0
  %v26 = vcvt.s32.f32 %v25
  %v27 = vmul.f32 %v14, %v26
  %v28 = vmul.f32 %v15, %v26
  %29 = vadd.xlane.f32.xlu0 %v27
  %v30 = vpop.xlane.xlu0 %29
  %31 = vadd.xlane.f32.xlu0 %v28
  %v32 = vpop.xlane.xlu0 %31
  %v33 = vmul.f32 %v30, 0.020833334
  %v34 = vmul.f32 %v32, 0.020833334
  %v35 = vmul.f32 %v17, %v26
  %v36 = vmul.f32 %v18, %v26
  %37 = vadd.xlane.f32.xlu0 %v35
  %v38 = vpop.xlane.xlu0 %37
  %39 = vadd.xlane.f32.xlu0 %v36
  %v40 = vpop.xlane.xlu0 %39
  %v41 = vmul.f32 %v38, 0.020833334
  %v42 = vmul.f32 %v40, 0.020833334
  %v43 = vmul.f32 %v20, %v26
  %v44 = vmul.f32 %v21, %v26
  %45 = vadd.xlane.f32.xlu0 %v43
  %v46 = vpop.xlane.xlu0 %45
  %47 = vadd.xlane.f32.xlu0 %v44
  %v48 = vpop.xlane.xlu0 %47
  %v49 = vmul.f32 %v46, 0.020833334
  %v50 = vmul.f32 %v48, 0.020833334
  %v51 = vsub.f32 %v14, %v33
  %v52 = vsub.f32 %v15, %v34
  %v53 = vmul.f32 %v51, %v26
  %v54 = vmul.f32 %v52, %v26
  %v55 = vsub.f32 %v17, %v41
  %v56 = vsub.f32 %v18, %v42
  %v57 = vmul.f32 %v55, %v26
  %v58 = vmul.f32 %v56, %v26
  %v59 = vsub.f32 %v20, %v49
  %v60 = vsub.f32 %v21, %v50
  %v61 = vmul.f32 %v59, %v26
  %v62 = vmul.f32 %v60, %v26
  %v63 = vmul.f32 %v53, %v53
  %v64 = vmul.f32 %v54, %v54
  %65 = vadd.xlane.f32.xlu0 %v63
  %v66 = vpop.xlane.xlu0 %65
  %67 = vadd.xlane.f32.xlu0 %v64
  %v68 = vpop.xlane.xlu0 %67
  %v69 = vmul.f32 %v53, %v57
  %v70 = vmul.f32 %v54, %v58
  %71 = vadd.xlane.f32.xlu0 %v69
  %v72 = vpop.xlane.xlu0 %71
  %73 = vadd.xlane.f32.xlu0 %v70
  %v74 = vpop.xlane.xlu0 %73
  %v75 = vmul.f32 %v53, %v61
  %v76 = vmul.f32 %v54, %v62
  %77 = vadd.xlane.f32.xlu0 %v75
  %v78 = vpop.xlane.xlu0 %77
  %79 = vadd.xlane.f32.xlu0 %v76
  %v80 = vpop.xlane.xlu0 %79
  %v81 = vmul.f32 %v57, %v57
  %v82 = vmul.f32 %v58, %v58
  %83 = vadd.xlane.f32.xlu0 %v81
  %v84 = vpop.xlane.xlu0 %83
  %85 = vadd.xlane.f32.xlu0 %v82
  %v86 = vpop.xlane.xlu0 %85
  %v87 = vmul.f32 %v57, %v61
  %v88 = vmul.f32 %v58, %v62
  %89 = vadd.xlane.f32.xlu0 %v87
  %v90 = vpop.xlane.xlu0 %89
  %91 = vadd.xlane.f32.xlu0 %v88
  %v92 = vpop.xlane.xlu0 %91
  %v93 = vmul.f32 %v61, %v61
  %v94 = vmul.f32 %v62, %v62
  %95 = vadd.xlane.f32.xlu0 %v93
  %v96 = vpop.xlane.xlu0 %95
  %97 = vadd.xlane.f32.xlu0 %v94
  %v98 = vpop.xlane.xlu0 %97
  %v99 = vadd.f32 %v66, %v84
  %v100 = vadd.f32 %v68, %v86
  %v101 = vadd.f32 %v99, %v96
  %v102 = vadd.f32 %v100, %v98
  %v103 = vmul.f32 %v101, 1e-06
  %v104 = vmul.f32 %v102, 1e-06
  %v105 = vadd.f32 %v103, 1e-12
  %v106 = vadd.f32 %v104, 1e-12
  %v107 = vadd.f32 %v66, %v105
  %v108 = vadd.f32 %v68, %v106
  %v109 = vadd.f32 %v84, %v105
  %v110 = vadd.f32 %v86, %v106
  %v111 = vadd.f32 %v96, %v105
  %v112 = vadd.f32 %v98, %v106
  %v113 = vmul.f32 %v109, %v111
  %v114 = vmul.f32 %v110, %v112
  %v115 = vmul.f32 %v90, %v90
  %v116 = vmul.f32 %v92, %v92
  %v117 = vsub.f32 %v113, %v115
  %v118 = vsub.f32 %v114, %v116
  %v119 = vmul.f32 %v72, %v111
  %v120 = vmul.f32 %v74, %v112
  %v121 = vmul.f32 %v90, %v78
  %v122 = vmul.f32 %v92, %v80
  %v123 = vsub.f32 %v119, %v121
  %v124 = vsub.f32 %v120, %v122
  %v125 = vsub.f32 0.0, %v123
  %v126 = vsub.f32 0.0, %v124
  %v127 = vmul.f32 %v72, %v90
  %v128 = vmul.f32 %v74, %v92
  %v129 = vmul.f32 %v109, %v78
  %v130 = vmul.f32 %v110, %v80
  %v131 = vsub.f32 %v127, %v129
  %v132 = vsub.f32 %v128, %v130
  %v133 = vmul.f32 %v107, %v111
  %v134 = vmul.f32 %v108, %v112
  %v135 = vmul.f32 %v78, %v78
  %v136 = vmul.f32 %v80, %v80
  %v137 = vsub.f32 %v133, %v135
  %v138 = vsub.f32 %v134, %v136
  %v139 = vmul.f32 %v107, %v90
  %v140 = vmul.f32 %v108, %v92
  %v141 = vmul.f32 %v72, %v78
  %v142 = vmul.f32 %v74, %v80
  %v143 = vsub.f32 %v139, %v141
  %v144 = vsub.f32 %v140, %v142
  %v145 = vsub.f32 0.0, %v143
  %v146 = vsub.f32 0.0, %v144
  %v147 = vmul.f32 %v107, %v109
  %v148 = vmul.f32 %v108, %v110
  %v149 = vmul.f32 %v72, %v72
  %v150 = vmul.f32 %v74, %v74
  %v151 = vsub.f32 %v147, %v149
  %v152 = vsub.f32 %v148, %v150
  %v153 = vmul.f32 %v107, %v117
  %v154 = vmul.f32 %v108, %v118
  %v155 = vmul.f32 %v72, %v125
  %v156 = vmul.f32 %v74, %v126
  %v157 = vadd.f32 %v153, %v155
  %v158 = vadd.f32 %v154, %v156
  %v159 = vmul.f32 %v78, %v131
  %v160 = vmul.f32 %v80, %v132
  %v161 = vadd.f32 %v157, %v159
  %v162 = vadd.f32 %v158, %v160
  %v163 = vrcp.pop %v161
  %v164 = vrcp.pop %v162
  %v165 = vmul.f32 %v161, %v163
  %v166 = vmul.f32 %v162, %v164
  %v167 = vsub.f32 2.0, %v165
  %v168 = vsub.f32 2.0, %v166
  %v169 = vmul.f32 %v163, %v167
  %v170 = vmul.f32 %v164, %v168
  %v171 = vmul.f32 %v117, %v169
  %v172 = vmul.f32 %v118, %v170
  %v173 = vmul.f32 %v125, %v169
  %v174 = vmul.f32 %v126, %v170
  %v175 = vmul.f32 %v131, %v169
  %v176 = vmul.f32 %v132, %v170
  %v177 = vmul.f32 %v137, %v169
  %v178 = vmul.f32 %v138, %v170
  %v179 = vmul.f32 %v145, %v169
  %v180 = vmul.f32 %v146, %v170
  %v181 = vmul.f32 %v151, %v169
  %v182 = vmul.f32 %v152, %v170
  %v183 = vld [vmem:[%s0] sm:$0x7]
  %v184 = vlaneseq
  %v185 = vshrl.u32 %v184, 7
  %v186 = vsub.s32 0, %v185
  %v187 = vrot.slane %v183, %v186
  %v188 = vmul.f32 %v187, %v53
  %v189 = vmul.f32 %v187, %v54
  %190 = vadd.xlane.f32.xlu0 %v188
  %v191 = vpop.xlane.xlu0 %190
  %192 = vadd.xlane.f32.xlu0 %v189
  %v193 = vpop.xlane.xlu0 %192
  %v194 = vmul.f32 %v187, %v57
  %v195 = vmul.f32 %v187, %v58
  %196 = vadd.xlane.f32.xlu0 %v194
  %v197 = vpop.xlane.xlu0 %196
  %198 = vadd.xlane.f32.xlu0 %v195
  %v199 = vpop.xlane.xlu0 %198
  %v200 = vmul.f32 %v187, %v61
  %v201 = vmul.f32 %v187, %v62
  %202 = vadd.xlane.f32.xlu0 %v200
  %v203 = vpop.xlane.xlu0 %202
  %204 = vadd.xlane.f32.xlu0 %v201
  %v205 = vpop.xlane.xlu0 %204
  %v206 = vlaneseq
  %v207 = vshrl.u32 %v206, 7
  %v208 = vsub.s32 1, %v207
  %v209 = vrot.slane %v183, %v208
  %v210 = vmul.f32 %v209, %v53
  %v211 = vmul.f32 %v209, %v54
  %212 = vadd.xlane.f32.xlu0 %v210
  %v213 = vpop.xlane.xlu0 %212
  %214 = vadd.xlane.f32.xlu0 %v211
  %v215 = vpop.xlane.xlu0 %214
  %v216 = vmul.f32 %v209, %v57
  %v217 = vmul.f32 %v209, %v58
  %218 = vadd.xlane.f32.xlu0 %v216
  %v219 = vpop.xlane.xlu0 %218
  %220 = vadd.xlane.f32.xlu0 %v217
  %v221 = vpop.xlane.xlu0 %220
  %v222 = vmul.f32 %v209, %v61
  %v223 = vmul.f32 %v209, %v62
  %224 = vadd.xlane.f32.xlu0 %v222
  %v225 = vpop.xlane.xlu0 %224
  %226 = vadd.xlane.f32.xlu0 %v223
  %v227 = vpop.xlane.xlu0 %226
  %v228 = vlaneseq
  %v229 = vshrl.u32 %v228, 7
  %v230 = vsub.s32 2, %v229
  %v231 = vrot.slane %v183, %v230
  %v232 = vmul.f32 %v231, %v53
  %v233 = vmul.f32 %v231, %v54
  %234 = vadd.xlane.f32.xlu0 %v232
  %v235 = vpop.xlane.xlu0 %234
  %236 = vadd.xlane.f32.xlu0 %v233
  %v237 = vpop.xlane.xlu0 %236
  %v238 = vmul.f32 %v231, %v57
  %v239 = vmul.f32 %v231, %v58
  %240 = vadd.xlane.f32.xlu0 %v238
  %v241 = vpop.xlane.xlu0 %240
  %242 = vadd.xlane.f32.xlu0 %v239
  %v243 = vpop.xlane.xlu0 %242
  %v244 = vmul.f32 %v231, %v61
  %v245 = vmul.f32 %v231, %v62
  %246 = vadd.xlane.f32.xlu0 %v244
  %v247 = vpop.xlane.xlu0 %246
  %248 = vadd.xlane.f32.xlu0 %v245
  %v249 = vpop.xlane.xlu0 %248
  %v250 = vmul.f32 %v191, %v171
  %v251 = vmul.f32 %v193, %v172
  %v252 = vmul.f32 %v197, %v173
  %v253 = vmul.f32 %v199, %v174
  %v254 = vadd.f32 %v250, %v252
  %v255 = vadd.f32 %v251, %v253
  %v256 = vmul.f32 %v203, %v175
  %v257 = vmul.f32 %v205, %v176
  %v258 = vadd.f32 %v254, %v256
  %v259 = vadd.f32 %v255, %v257
  %v260 = vmul.f32 %v191, %v173
  %v261 = vmul.f32 %v193, %v174
  %v262 = vmul.f32 %v197, %v177
  %v263 = vmul.f32 %v199, %v178
  %v264 = vadd.f32 %v260, %v262
  %v265 = vadd.f32 %v261, %v263
  %v266 = vmul.f32 %v203, %v179
  %v267 = vmul.f32 %v205, %v180
  %v268 = vadd.f32 %v264, %v266
  %v269 = vadd.f32 %v265, %v267
  %v270 = vmul.f32 %v191, %v175
  %v271 = vmul.f32 %v193, %v176
  %v272 = vmul.f32 %v197, %v179
  %v273 = vmul.f32 %v199, %v180
  %v274 = vadd.f32 %v270, %v272
  %v275 = vadd.f32 %v271, %v273
  %v276 = vmul.f32 %v203, %v181
  %v277 = vmul.f32 %v205, %v182
  %v278 = vadd.f32 %v274, %v276
  %v279 = vadd.f32 %v275, %v277
  %v280 = vmul.f32 %v213, %v171
  %v281 = vmul.f32 %v215, %v172
  %v282 = vmul.f32 %v219, %v173
  %v283 = vmul.f32 %v221, %v174
  %v284 = vadd.f32 %v280, %v282
  %v285 = vadd.f32 %v281, %v283
  %v286 = vmul.f32 %v225, %v175
  %v287 = vmul.f32 %v227, %v176
  %v288 = vadd.f32 %v284, %v286
  %v289 = vadd.f32 %v285, %v287
  %v290 = vmul.f32 %v213, %v173
  %v291 = vmul.f32 %v215, %v174
  %v292 = vmul.f32 %v219, %v177
  %v293 = vmul.f32 %v221, %v178
  %v294 = vadd.f32 %v290, %v292
  %v295 = vadd.f32 %v291, %v293
  %v296 = vmul.f32 %v225, %v179
  %v297 = vmul.f32 %v227, %v180
  %v298 = vadd.f32 %v294, %v296
  %v299 = vadd.f32 %v295, %v297
  %v300 = vmul.f32 %v213, %v175
  %v301 = vmul.f32 %v215, %v176
  %v302 = vmul.f32 %v219, %v179
  %v303 = vmul.f32 %v221, %v180
  %v304 = vadd.f32 %v300, %v302
  %v305 = vadd.f32 %v301, %v303
  %v306 = vmul.f32 %v225, %v181
  %v307 = vmul.f32 %v227, %v182
  %v308 = vadd.f32 %v304, %v306
  %v309 = vadd.f32 %v305, %v307
  %v310 = vmul.f32 %v235, %v171
  %v311 = vmul.f32 %v237, %v172
  %v312 = vmul.f32 %v241, %v173
  %v313 = vmul.f32 %v243, %v174
  %v314 = vadd.f32 %v310, %v312
  %v315 = vadd.f32 %v311, %v313
  %v316 = vmul.f32 %v247, %v175
  %v317 = vmul.f32 %v249, %v176
  %v318 = vadd.f32 %v314, %v316
  %v319 = vadd.f32 %v315, %v317
  %v320 = vmul.f32 %v235, %v173
  %v321 = vmul.f32 %v237, %v174
  %v322 = vmul.f32 %v241, %v177
  %v323 = vmul.f32 %v243, %v178
  %v324 = vadd.f32 %v320, %v322
  %v325 = vadd.f32 %v321, %v323
  %v326 = vmul.f32 %v247, %v179
  %v327 = vmul.f32 %v249, %v180
  %v328 = vadd.f32 %v324, %v326
  %v329 = vadd.f32 %v325, %v327
  %v330 = vmul.f32 %v235, %v175
  %v331 = vmul.f32 %v237, %v176
  %v332 = vmul.f32 %v241, %v179
  %v333 = vmul.f32 %v243, %v180
  %v334 = vadd.f32 %v330, %v332
  %v335 = vadd.f32 %v331, %v333
  %v336 = vmul.f32 %v247, %v181
  %v337 = vmul.f32 %v249, %v182
  %v338 = vadd.f32 %v334, %v336
  %v339 = vadd.f32 %v335, %v337
  %v340 = vld [vmem:[%s1] sm:$0x7]
  %v341 = vmul.f32 %v258, %v51
  %v342 = vmul.f32 %v259, %v52
  %v343 = vmul.f32 %v268, %v55
  %v344 = vmul.f32 %v269, %v56
  %v345 = vadd.f32 %v341, %v343
  %v346 = vadd.f32 %v342, %v344
  %v347 = vmul.f32 %v278, %v59
  %v348 = vmul.f32 %v279, %v60
  %v349 = vadd.f32 %v345, %v347
  %v350 = vadd.f32 %v346, %v348
  %v351 = vlaneseq
  %v352 = vshrl.u32 %v351, 7
  %v353 = vsub.s32 0, %v352
  %v354 = vrot.slane %v340, %v353
  %v355 = vadd.f32 %v349, %v354
  %v356 = vadd.f32 %v350, %v354
  %357 = vst [vmem:[%s3] sm:$0xff] %v355
  %358 = vst [vmem:[%s3 + $0x8] sm:$0xff] %v356
  %v359 = vmul.f32 %v288, %v51
  %v360 = vmul.f32 %v289, %v52
  %v361 = vmul.f32 %v298, %v55
  %v362 = vmul.f32 %v299, %v56
  %v363 = vadd.f32 %v359, %v361
  %v364 = vadd.f32 %v360, %v362
  %v365 = vmul.f32 %v308, %v59
  %v366 = vmul.f32 %v309, %v60
  %v367 = vadd.f32 %v363, %v365
  %v368 = vadd.f32 %v364, %v366
  %v369 = vlaneseq
  %v370 = vshrl.u32 %v369, 7
  %v371 = vsub.s32 1, %v370
  %v372 = vrot.slane %v340, %v371
  %v373 = vadd.f32 %v367, %v372
  %v374 = vadd.f32 %v368, %v372
  %s375 = scalar_lea.vmem %s3, 16
  %376 = vst [vmem:[%s375] sm:$0xff] %v373
  %377 = vst [vmem:[%s375 + $0x8] sm:$0xff] %v374
  %v378 = vmul.f32 %v318, %v51
  %v379 = vmul.f32 %v319, %v52
  %v380 = vmul.f32 %v328, %v55
  %v381 = vmul.f32 %v329, %v56
  %v382 = vadd.f32 %v378, %v380
  %v383 = vadd.f32 %v379, %v381
  %v384 = vmul.f32 %v338, %v59
  %v385 = vmul.f32 %v339, %v60
  %v386 = vadd.f32 %v382, %v384
  %v387 = vadd.f32 %v383, %v385
  %v388 = vlaneseq
  %v389 = vshrl.u32 %v388, 7
  %v390 = vsub.s32 2, %v389
  %v391 = vrot.slane %v340, %v390
  %v392 = vadd.f32 %v386, %v391
  %v393 = vadd.f32 %v387, %v391
  %s394 = scalar_lea.vmem %s3, 32
  %395 = vst [vmem:[%s394] sm:$0xff] %v392
  %396 = vst [vmem:[%s394 + $0x8] sm:$0xff] %v393
  // Predicated region
  $region14: #{speech_vovit_forward.3} parent=0 // pred_check
    _
  $region15: #{speech_vovit_forward.3} parent=0 // pred_check_branch
    %398 = sbr.rel (0) target = $region17
  $region16: #{speech_vovit_forward.3} parent=0 // pred_region
    _
  $region17: #{speech_vovit_forward.3} parent=0 // pred_fallthru
    _
  // Predicated region
  $region18: #{speech_vovit_forward.3} parent=0 // pred_check
    _
  $region19: #{speech_vovit_forward.3} parent=0 // pred_check_branch
    %400 = sbr.rel (0) target = $region21
  $region20: #{speech_vovit_forward.3} parent=0 // pred_region
    _
  $region21: #{speech_vovit_forward.3} parent=0 // pred_fallthru
    _

</llo_original>
